<compile_context>
chip_gen: v7x
topology: tpu7x:2x2x1
jax: 0.10.0
libtpu: 0.0.40
codegen_flags: <defaults>
</compile_context>

<pallas_src>
import functools

import jax
import jax.numpy as jnp
from jax import lax
from jax.experimental import pallas as pl
from jax.experimental.pallas import tpu as pltpu

_LANES = 128
_SUB = 512  # in-kernel spatial sub-slab width (lanes)


def _disparity_regression_kernel(x_ref, out_ref, *, sub):
    # x_ref:   (1, D, TS) block of the flattened cost volume
    # out_ref: (1, 1, TS) block of the flattened disparity map
    d = x_ref.shape[1]
    ts = x_ref.shape[2]
    # Weights 0..D-1 generated in-kernel (no DMA'd (1, D, 1, 1) tensor).
    disp = lax.broadcasted_iota(jnp.int32, (d, 1), 0).astype(jnp.float32)  # (D, 1)

    def body(i, carry):
        off = pl.multiple_of(i * sub, sub)
        xs = x_ref[0, :, pl.ds(off, sub)].astype(jnp.float32)   # (D, sub)
        res = jnp.sum(xs * disp, axis=0)                        # (sub,) leading-dim reduce (VPU)
        out_ref[0, 0, pl.ds(off, sub)] = res.astype(out_ref.dtype)
        return carry

    lax.fori_loop(0, ts // sub, body, 0, unroll=False)


def _round_up(v, m):
    return ((v + m - 1) // m) * m


def disparity_regression(x, maxdisp, *, target_block_bytes=8 * 1024 * 1024):
    """out = sum_d x[:, d] * d (keepdim), matching torch.sum(x * disp, 1, keepdim=True)."""
    N, D, H, W = x.shape
    assert D == maxdisp
    S = H * W
    itemsize = jnp.dtype(x.dtype).itemsize

    # Lane-dense spatial tile sized from the VMEM budget (no artificial 8K cap).
    ts = target_block_bytes // (D * itemsize)
    ts = max(_LANES, min(ts, 32768))
    if N == 1:
        # v7x megacore: make sure there are >= 2 grid steps to shard across TCs.
        ts = min(ts, max(_LANES, _round_up(pl.cdiv(S, 2), _LANES)))
    ts = min(ts, _round_up(S, _LANES))
    # Make the tile a clean multiple of the in-kernel sub-slab width.
    sub = _SUB if ts >= _SUB else _LANES
    ts = (ts // sub) * sub

    n_spatial = pl.cdiv(S, ts)  # ragged last block handled by Pallas (no jnp.pad)
    grid = (N, n_spatial)

    x_flat = x.reshape(N, D, S)

    # VMEM budget: double-buffered input + output blocks, plus inner-loop intermediates.
    block_in = D * ts * itemsize
    block_out = ts * itemsize
    inner = 3 * D * sub * 4
    need = 2 * (block_in + block_out) + inner
    vmem_limit = int(min(max(need + (4 << 20), 16 << 20), 40 << 20))

    out_flat = pl.pallas_call(
        functools.partial(_disparity_regression_kernel, sub=sub),
        out_shape=jax.ShapeDtypeStruct((N, 1, S), x.dtype),
        grid_spec=pltpu.PrefetchScalarGridSpec(
            num_scalar_prefetch=0,
            grid=grid,
            in_specs=[pl.BlockSpec((1, D, ts), lambda n, s: (n, 0, s))],
            out_specs=pl.BlockSpec((1, 1, ts), lambda n, s: (n, 0, s)),
        ),
        compiler_params=pltpu.CompilerParams(
            dimension_semantics=("parallel", "parallel"),
            vmem_limit_bytes=vmem_limit,
        ),
    )(x_flat)

    return out_flat.reshape(N, 1, H, W)


if __name__ == "__main__":
    key = jax.random.PRNGKey(0)
    N, maxdisp, H, W = 2, 4, 16, 16
    # Mimic a softmax-ed cost volume (values are arbitrary for the kernel itself).
    logits = jax.random.normal(key, (N, maxdisp, H, W), dtype=jnp.float32)
    x = jax.nn.softmax(logits, axis=1)

    out = disparity_regression(x, maxdisp)
    out = jax.block_until_ready(out)

    # Reference check (pure JAX, same semantics as the torch forward).
    disp = jnp.arange(maxdisp, dtype=x.dtype).reshape(1, maxdisp, 1, 1)
    ref = jnp.sum(x * disp, axis=1, keepdims=True)
    assert out.shape == (N, 1, H, W)
    assert jnp.allclose(out, ref, atol=1e-5, rtol=1e-5)

    # Non-multiple-of-128 spatial size, N == 1 (megacore split path), bf16 input.
    x2 = jax.nn.softmax(
        jax.random.normal(jax.random.PRNGKey(0), (1, 8, 13, 27), dtype=jnp.float32), axis=1
    ).astype(jnp.bfloat16)
    out2 = jax.block_until_ready(disparity_regression(x2, 8))
    ref2 = jnp.sum(
        x2.astype(jnp.float32) * jnp.arange(8, dtype=jnp.float32).reshape(1, 8, 1, 1),
        axis=1, keepdims=True,
    ).astype(jnp.bfloat16)
    assert out2.shape == (1, 1, 13, 27)
    assert jnp.allclose(out2.astype(jnp.float32), ref2.astype(jnp.float32), atol=5e-2, rtol=5e-2)

    # TODO(synk): if the upstream pipeline always softmaxes over the disparity axis,
    # fuse softmax + regression into one kernel to avoid re-reading the (N,D,H,W) volume.

    print("KERNEL_OK")
</pallas_src>

<mosaic_0001>
module attributes {stable_mosaic.version = 11 : i64} {
  func.func @_disparity_regression_kernel(%arg0: i32, %arg1: i32, %arg2: memref<1x4x256xf32, #tpu.memory_space<vmem>>, %arg3: memref<1x1x256xf32, #tpu.memory_space<vmem>>) attributes {dimension_semantics = [#tpu.dimension_semantics<parallel>, #tpu.dimension_semantics<parallel>], iteration_bounds = array<i64: 2, 1>, scalar_prefetch = 0 : i64, scratch_operands = 0 : i64, tpu.core_type = #tpu.core_type<tc>, window_params = [{transform_indices = @transform_0, window_bounds = array<i64: 1, 4, 256>}, {transform_indices = @transform_1, window_bounds = array<i64: 1, 1, 256>}]} {
    %0 = tpu.iota {dimensions = array<i32: 0>} : vector<4x1xi32>
    %1 = arith.sitofp %0 : vector<4x1xi32> to vector<4x1xf32>
    %c0_i32 = arith.constant 0 : i32
    %c2_i32 = arith.constant 2 : i32
    %2 = arith.addi %c0_i32, %c2_i32 : i32
    %c1_i32 = arith.constant 1 : i32
    scf.for %arg4 = %c0_i32 to %2 step %c1_i32  : i32 {
      %c128_i32 = arith.constant 128 : i32
      %3 = arith.muli %arg4, %c128_i32 : i32
      %4 = tpu.assume_multiple %3, 128 : i32
      %c0 = arith.constant 0 : index
      %c0_1 = arith.constant 0 : index
      %5 = arith.index_cast %4 : i32 to index
      %6 = vector.load %arg2[%c0, %c0_1, %5] : memref<1x4x256xf32, #tpu.memory_space<vmem>>, vector<1x4x128xf32>
      %7 = vector.shape_cast %6 : vector<1x4x128xf32> to vector<4x128xf32>
      %8 = vector.broadcast %1 : vector<4x1xf32> to vector<4x128xf32>
      %9 = arith.mulf %7, %8 : vector<4x128xf32>
      %cst = arith.constant dense<0.000000e+00> : vector<128xf32>
      %10 = vector.multi_reduction <add>, %9, %cst [0] : vector<4x128xf32> to vector<128xf32>
      %c0_2 = arith.constant 0 : index
      %c0_3 = arith.constant 0 : index
      %11 = arith.index_cast %4 : i32 to index
      %12 = vector.load %arg3[%c0_2, %c0_3, %11] : memref<1x1x256xf32, #tpu.memory_space<vmem>>, vector<1x1x128xf32>
      %13 = vector.shape_cast %12 : vector<1x1x128xf32> to vector<128xf32>
      %14 = vector.shape_cast %10 : vector<128xf32> to vector<1x1x128xf32>
      tpu.vector_store %arg3[%c0_2, %c0_3, %11], %14 {strides = array<i32>} : memref<1x1x256xf32, #tpu.memory_space<vmem>>, vector<1x1x128xf32>,
    }
    %c2_i32_0 = arith.constant 2 : i32
    return
  }
  func.func @transform_0(%arg0: i32, %arg1: i32) -> (i32, i32, i32) {
    %c0_i32 = arith.constant 0 : i32
    %c0_i32_0 = arith.constant 0 : i32
    return %arg0, %c0_i32, %arg1 : i32, i32, i32
  }
  func.func @transform_1(%arg0: i32, %arg1: i32) -> (i32, i32, i32) {
    %c0_i32 = arith.constant 0 : i32
    %c0_i32_0 = arith.constant 0 : i32
    return %arg0, %c0_i32, %arg1 : i32, i32, i32
  }
}

</mosaic_0001>

<llo_original>
// kernel: tpu_custom_call.1
$region0: #{tpu_custom_call.1}
  #allocation0 [shape = 'u32[]', space=smem, size = 0x4, offset = 0x4, fixed_abs, tag = 'smem constant byte address 0x4 - core index']
  #allocation1 [shape = 'u32[144,128]{1,0:T(1,128)}', space=vmem, size = 0x12000, scoped, tag = 'internal scratch']
  %s0 = inlined_call_operand.hbm [shape: f32[2,4,256], index: 0, kind: input, shape index: {}]
  %s1 = inlined_call_operand.hbm [shape: f32[2,1,256], index: 1, kind: output, shape index: {}]
  %s2 = sld [smem:[#allocation0]]
  $region48: #{tpu_custom_call.1} parent=0
    _
  %s4 = ssub.s32 1, %s2
  %s5 = scalar_select 0, %s4, %s2
  $region1: #{tpu_custom_call.1} parent=0
    #allocation2 [shape = 'u8[8192]{0}', space=vmem, size = 0x2000, scoped, tag = 'input window, operand 0']
    #allocation3 [shape = 's32[2]{0}', space=sflag, size = 0x8, scoped, tag = 'scoped memory for tpu_custom_call.1']
    #allocation4 [shape = 's32[2]{0}', space=sflag, size = 0x8, scoped, tag = 'scoped memory for tpu_custom_call.1']
    #allocation5 [shape = 'u8[2048]{0}', space=vmem, size = 0x800, scoped, tag = 'output window, operand 0']
    %6 = vsyncpa [#allocation3], 0
    %s7 = scalar_lea.sflag [#allocation3], 1
    %8 = vsyncpa %s7, 0
    %9 = vsyncpa [#allocation4], 0
    %s10 = scalar_lea.sflag [#allocation4], 1
    %11 = vsyncpa %s10, 0
    loop: start=0, step=1, limit=4
    $region2: #{tpu_custom_call.1} parent=1 // loop_pre_header
      _
    $region3: #{tpu_custom_call.1} parent=1 // loop_header
      %s13 = sphi 0, %s17
      %p14 = scmp.ge.s32.totalorder %s13, 4
      %s20 = sphi 0, %s32
      %s21 = sphi 0, %s28
      %s22 = sphi 0, %s20
      %s23 = sphi 0, %s21
      %s24 = sphi 0, %s22
      %s25 = sphi 0, %s23
      %s37 = sphi 0, %s39
      %s40 = sphi 0, %s37
      %s41 = sphi 0, %s40
      %s57 = sphi 0, %s41
      %s65 = sphi 0, %s67
      %s68 = sphi 0, %s65
      %s69 = sphi 0, %s68
      %s85 = sphi 0, %s69
    $region4: #{tpu_custom_call.1} parent=1 // loop_header_branch
      %16 = sbr.rel (%p14) target = $region8
    $region5: #{tpu_custom_call.1} parent=1 // loop_body
      %s18 = ssub.s32 %s13, 1
      %s19 = ssub.s32 %s13, 2
      %s26 = sadd.s32 1, %s21
      %p27 = scmp.ge.s32.totalorder %s26, 1
      %s28 = scalar_select %p27, 0, %s26
      %s29 = sadd.s32 1, %s20
      %s30 = scalar_select %p27, %s29, %s20
      %p31 = scmp.ge.s32.totalorder %s30, 2
      %s32 = scalar_select %p31, 0, %s30
      %s33 = ssub.s32 %s20, %s32
      %s34 = ssub.s32 %s21, %s28
      %s35 = sor.u32 %s33, %s34
      %p36 = scmp.eq.s32.totalorder %s35, 0
      %s38 = sadd.s32 %s37, 1
      %s39 = scalar_select %p36, %s37, %s38
      %p42 = pneg %p36
      %p43 = scmp.eq.s32.totalorder %s13, 1
      %p44 = por %p42, %p43
      %p45 = scmp.ne.s32.totalorder %s37, %s40
      %p46 = scmp.eq.s32.totalorder %s13, 0
      %p47 = por %p45, %p46
      %p48 = scmp.ne.s32.totalorder %s37, %s40
      %p49 = scmp.eq.s32.totalorder %s18, 1
      %p50 = por %p48, %p49
      %p51 = scmp.ne.s32.totalorder %s40, %s41
      %p52 = scmp.eq.s32.totalorder %s18, 0
      %p53 = por %p51, %p52
      %p54 = scmp.ne.s32.totalorder %s40, %s41
      %p55 = scmp.eq.s32.totalorder %s19, 1
      %p56 = por %p54, %p55
      %p58 = scmp.ne.s32.totalorder %s41, %s57
      %p59 = scmp.eq.s32.totalorder %s19, 0
      %p60 = por %p58, %p59
      %s61 = ssub.s32 %s20, %s32
      %s62 = ssub.s32 %s21, %s28
      %s63 = sor.u32 %s61, %s62
      %p64 = scmp.eq.s32.totalorder %s63, 0
      %s66 = sadd.s32 %s65, 1
      %s67 = scalar_select %p64, %s65, %s66
      %p70 = pneg %p64
      %p71 = scmp.eq.s32.totalorder %s13, 1
      %p72 = por %p70, %p71
      %p73 = scmp.ne.s32.totalorder %s65, %s68
      %p74 = scmp.eq.s32.totalorder %s13, 0
      %p75 = por %p73, %p74
      %p76 = scmp.ne.s32.totalorder %s65, %s68
      %p77 = scmp.eq.s32.totalorder %s18, 1
      %p78 = por %p76, %p77
      %p79 = scmp.ne.s32.totalorder %s68, %s69
      %p80 = scmp.eq.s32.totalorder %s18, 0
      %p81 = por %p79, %p80
      %p82 = scmp.ne.s32.totalorder %s68, %s69
      %p83 = scmp.eq.s32.totalorder %s19, 1
      %p84 = por %p82, %p83
      %p86 = scmp.ne.s32.totalorder %s69, %s85
      %p87 = scmp.eq.s32.totalorder %s19, 0
      %p88 = por %p86, %p87
      %p89 = scmp.le.s32.totalorder 1, %s13
      %p90 = scmp.lt.s32.totalorder %s13, 3
      %p91 = pnand %p89, %p90
      %p92 = pneg %p91
      // Predicated region
      $region9: #{tpu_custom_call.1} parent=5 // pred_check
        _
      $region10: #{tpu_custom_call.1} parent=5 // pred_check_branch
        %94 = sbr.rel (%p91) target = $region12
      $region11: #{tpu_custom_call.1} parent=5 // pred_region
        %s95 = ssub.s32 %s13, 1
      $region12: #{tpu_custom_call.1} parent=5 // pred_fallthru
        _
      %p96 = scmp.lt.s32.totalorder %s13, 2
      // Predicated region
      $region13: #{tpu_custom_call.1} parent=5 // pred_check
        %p97 = pneg %p96
      $region14: #{tpu_custom_call.1} parent=5 // pred_check_branch
        %99 = sbr.rel (%p97) target = $region16
      $region15: #{tpu_custom_call.1} parent=5 // pred_region
        // Predicated region
        $region17: #{tpu_custom_call.1} parent=15 // pred_check
          %p100 = pneg %p47
        $region18: #{tpu_custom_call.1} parent=15 // pred_check_branch
          %102 = sbr.rel (%p100) target = $region20
        $region19: #{tpu_custom_call.1} parent=15 // pred_region
          %s103 = sand.u32 %s37, 1
          %s104 = scalar_lea.sflag [#allocation3], %s103
          %s105 = sand.u32 %s37, 1
          %s106 = smul.addr %s105, 8
          %s107 = scalar_lea.vmem [#allocation2], %s106
          %s108 = smul.u32 2, %s21
          %s110 = ssub.s32 128, 128
          %111 = vsyncadd %s104, %s110
          %s112 = smul.addr %s20, 2
          %s113 = sadd.s32 %s108, %s112
          %s114 = smul.addr %s113, 64
          %s115 = scalar_lea.hbm %s0, %s114
          %s117 = sshll.u32 %s107, 4
          %s118 = int_to_ptr.vmem [resolvable:$true] %s117
          %120 = dma.hbm_to_vmem [thread:$0]  %s115, 128, %s118, %s104
        $region20: #{tpu_custom_call.1} parent=15 // pred_fallthru
          _
      $region16: #{tpu_custom_call.1} parent=5 // pred_fallthru
        _
      %p121 = scmp.le.s32.totalorder 1, %s13
      %p122 = scmp.lt.s32.totalorder %s13, 3
      %p123 = pnand %p121, %p122
      %p124 = pneg %p123
      // Predicated region
      $region21: #{tpu_custom_call.1} parent=5 // pred_check
        _
      $region22: #{tpu_custom_call.1} parent=5 // pred_check_branch
        %126 = sbr.rel (%p123) target = $region24
      $region23: #{tpu_custom_call.1} parent=5 // pred_region
        %s127 = ssub.s32 %s13, 1
        %s128 = sand.u32 %s40, 1
        %s129 = scalar_lea.sflag [#allocation3], %s128
        %s130 = sand.u32 %s40, 1
        %s131 = smul.addr %s130, 8
        %s132 = scalar_lea.vmem [#allocation2], %s131
        // Predicated region
        $region25: #{tpu_custom_call.1} parent=23 // pred_check
          %p133 = pneg %p53
        $region26: #{tpu_custom_call.1} parent=23 // pred_check_branch
          %135 = sbr.rel (%p133) target = $region28
        $region27: #{tpu_custom_call.1} parent=23 // pred_region
          %136 = dma.done %s129, 128
        $region28: #{tpu_custom_call.1} parent=23 // pred_fallthru
          _
        %s137 = sand.u32 %s40, 1
        %s138 = scalar_lea.sflag [#allocation3], %s137
        %s139 = sand.u32 %s40, 1
        %s140 = smul.addr %s139, 8
        %s141 = scalar_lea.vmem [#allocation2], %s140
        %p142 = pneg %p53
        %p143 = pneg %p50
        %p144 = pneg %p81
        %p145 = pneg %p78
        %s146 = sand.u32 %s68, 1
        %s147 = scalar_lea.sflag [#allocation4], %s146
        %s148 = sand.u32 %s68, 1
        %s149 = smul.addr %s148, 2
        %s150 = scalar_lea.vmem [#allocation5], %s149
        %s151 = smul.u32 2, %s23
        %s152 = smul.u32 2, %s23
        %v153 = vlaneseq
        %v154 = vshrl.u32 %v153, 7
        %v155 = vcvt.s32.f32 %v154
        loop: start=0, step=1, limit=2
        $region29: #{tpu_custom_call.1} parent=23 // loop_pre_header
          _
        $region30: #{tpu_custom_call.1} parent=23 // loop_header
          %s157 = sphi 0, %s161
          %p158 = scmp.ge.s32.totalorder %s157, 2
        $region31: #{tpu_custom_call.1} parent=23 // loop_header_branch
          %160 = sbr.rel (%p158) target = $region35
        $region32: #{tpu_custom_call.1} parent=23 // loop_body
          %s162 = smul.u32 %s157, 128
          %s163 = sshra.s32 %s162, 7
          %s164 = sand.u32 %s162, 127
          %s165 = smul.addr %s163, 4
          %s166 = scalar_lea.vmem %s132, %s165 [#allocation2]
          %v167 = vld [vmem:[%s166] sm:$0xf]
          %v168 = vmul.f32 %v167, %v155
          %vm169 = vcmask 1043456
          %v170 = vsel %vm169, %v168, 0.0
          %v171 = vrot.slane %v170, 4
          %v172 = vadd.f32 %v170, %v171
          %v173 = vrot.slane %v172, 2
          %v174 = vadd.f32 %v172, %v173
          %v175 = vrot.slane %v174, 1
          %v176 = vadd.f32 %v174, %v175
          %s177 = scalar_lea.vmem %s150, %s163 [#allocation5]
          %v178 = vlaneseq
          %vm179 = vcmp.ge.s32.totalorder %v178, 0
          %vm180 = vcmp.lt.s32.totalorder %v178, 128
          %vm181 = vmand %vm179, %vm180
          %182 = vst.msk [vmem:[%s177] sm:$0x1] %vm181, %v176
        $region33: #{tpu_custom_call.1} parent=23 // loop_footer
          %s161 = sadd.s32 1, %s157
        $region34: #{tpu_custom_call.1} parent=23 // loop_footer_branch
          %156 = sbr.rel target = $region30
        $region35: #{tpu_custom_call.1} parent=23 // loop_exit
          _
        %s183 = sand.u32 %s68, 1
        %s184 = scalar_lea.sflag [#allocation4], %s183
        %s185 = sand.u32 %s68, 1
        %s186 = smul.addr %s185, 2
        %s187 = scalar_lea.vmem [#allocation5], %s186
        // Predicated region
        $region36: #{tpu_custom_call.1} parent=23 // pred_check
          %p188 = pneg %p78
        $region37: #{tpu_custom_call.1} parent=23 // pred_check_branch
          %190 = sbr.rel (%p188) target = $region39
        $region38: #{tpu_custom_call.1} parent=23 // pred_region
          %s191 = smul.u32 2, %s23
          %s193 = ssub.s32 32, 32
          %194 = vsyncadd %s184, %s193
          %s195 = smul.addr %s22, 2
          %s196 = sadd.s32 %s191, %s195
          %s197 = smul.addr %s196, 16
          %s198 = scalar_lea.hbm %s1, %s197
          %s200 = sshll.u32 %s187, 4
          %s201 = int_to_ptr.vmem [resolvable:$true] %s200
          %203 = dma.vmem_to_hbm [thread:$0]  %s201, 32, %s198, %s184
        $region39: #{tpu_custom_call.1} parent=23 // pred_fallthru
          _
      $region24: #{tpu_custom_call.1} parent=5 // pred_fallthru
        _
      %p204 = scmp.le.s32.totalorder 2, %s13
      // Predicated region
      $region40: #{tpu_custom_call.1} parent=5 // pred_check
        %p205 = pneg %p204
      $region41: #{tpu_custom_call.1} parent=5 // pred_check_branch
        %207 = sbr.rel (%p205) target = $region43
      $region42: #{tpu_custom_call.1} parent=5 // pred_region
        %s208 = ssub.s32 %s13, 2
        // Predicated region
        $region44: #{tpu_custom_call.1} parent=42 // pred_check
          %p209 = pneg %p84
        $region45: #{tpu_custom_call.1} parent=42 // pred_check_branch
          %211 = sbr.rel (%p209) target = $region47
        $region46: #{tpu_custom_call.1} parent=42 // pred_region
          %s212 = sand.u32 %s69, 1
          %s213 = scalar_lea.sflag [#allocation4], %s212
          %s214 = sand.u32 %s69, 1
          %s215 = smul.addr %s214, 2
          %s216 = scalar_lea.vmem [#allocation5], %s215
          %217 = dma.done %s213, 32
        $region47: #{tpu_custom_call.1} parent=42 // pred_fallthru
          _
      $region43: #{tpu_custom_call.1} parent=5 // pred_fallthru
        _
    $region6: #{tpu_custom_call.1} parent=1 // loop_footer
      %s17 = sadd.s32 1, %s13
    $region7: #{tpu_custom_call.1} parent=1 // loop_footer_branch
      %12 = sbr.rel target = $region3
    $region8: #{tpu_custom_call.1} parent=1 // loop_exit
      _
    %218 = vsyncpa [#allocation3], 1
    %s219 = scalar_lea.sflag [#allocation3], 1
    %220 = vsyncpa %s219, 1
    %221 = vsyncpa [#allocation4], 1
    %s222 = scalar_lea.sflag [#allocation4], 1
    %223 = vsyncpa %s222, 1

</llo_original>
